<compile_context>
chip_gen: v7x
topology: tpu7x:2x2x1
jax: 0.10.0
libtpu: 0.0.40
codegen_flags: <defaults>
</compile_context>

<pallas_src>
import functools

import jax
import jax.numpy as jnp
from jax import lax
from jax.experimental import pallas as pl
from jax.experimental.pallas import tpu as pltpu

# Fixed "weights" of the module: gray coefficients; the sparse 3x3 gradient
# kernels are folded analytically into shifted differences inside the kernel.
_GRAY_COEFFS = (65.738 / 256.0, 129.057 / 256.0, 25.064 / 256.0)


def _grad_kernel(*refs, coeffs, tb, th, w, has_halo):
    # refs: (x_ref, halo_ref, o_ref) if has_halo else (x_ref, o_ref)
    #   x_ref:    (TB, C, TH, W)   input row-tile for TB images
    #   halo_ref: (TB, 1, 2C, W)   rows just above/below this tile (raw channels)
    #   o_ref:    (TB, 1, TH, W)   gradient-magnitude output tile
    if has_halo:
        x_ref, halo_ref, o_ref = refs
    else:
        x_ref, o_ref = refs
        halo_ref = None
    c = len(coeffs)

    # Boundary masks: loop-invariant, computed once per grid step.
    row = lax.broadcasted_iota(jnp.int32, (th, w), 0)
    col = lax.broadcasted_iota(jnp.int32, (th, w), 1)
    mask_top = row == 0
    mask_bot = row == th - 1
    mask_l = col == 0
    mask_r = col == w - 1

    def process_image(t):
        # --- gray conversion: per-channel f32 accumulation (no (C,TH,W) copy).
        if c == 1:
            g = x_ref[t, 0].astype(jnp.float32)              # coeff == 1.0
        else:
            g = coeffs[0] * x_ref[t, 0].astype(jnp.float32)  # (TH, W)
            for ci in range(1, c):
                g = g + coeffs[ci] * x_ref[t, ci].astype(jnp.float32)

        if has_halo:
            halos = halo_ref[t, 0].astype(jnp.float32)       # (2C, W)
            if c == 1:
                g_top = halos[0:1, :]
                g_bot = halos[1:2, :]
            else:
                g_top = coeffs[0] * halos[0:1, :]
                g_bot = coeffs[0] * halos[c:c + 1, :]
                for ci in range(1, c):
                    g_top = g_top + coeffs[ci] * halos[ci:ci + 1, :]
                    g_bot = g_bot + coeffs[ci] * halos[c + ci:c + ci + 1, :]

        # --- vertical gradient: x_v(i,.) = g(i+1,.) - g(i-1,.)
        # In-tile neighbours from sublane rolls (XLU); the wrapped boundary
        # rows are replaced with the halo rows (true neighbour at interior
        # tile borders, zero at the image border) or with 0 when no halo.
        if th > 1:
            up = pltpu.roll(g, 1, axis=0)         # up[i] = g[i-1]  (row 0 wraps)
            dn = pltpu.roll(g, th - 1, axis=0)    # dn[i] = g[i+1]  (row TH-1 wraps)
        else:
            up = g
            dn = g
        if has_halo:
            up = jnp.where(mask_top, g_top, up)   # (1, W) broadcasts over rows
            dn = jnp.where(mask_bot, g_bot, dn)
        else:
            up = jnp.where(mask_top, 0.0, up)
            dn = jnp.where(mask_bot, 0.0, dn)
        x_v = dn - up

        # --- horizontal gradient: x_h(.,j) = g(.,j+1) - g(.,j-1)
        if w > 1:
            left = pltpu.roll(g, 1, axis=1)       # left[j]  = g[j-1] (col 0 wraps)
            right = pltpu.roll(g, w - 1, axis=1)  # right[j] = g[j+1] (col W-1 wraps)
            x_h = jnp.where(mask_r, 0.0, right) - jnp.where(mask_l, 0.0, left)
        else:
            x_h = jnp.zeros_like(g)

        out = jnp.sqrt(x_v * x_v + x_h * x_h + 1e-6)
        o_ref[t, 0] = out.astype(o_ref.dtype)

    if tb == 1:
        process_image(0)
    else:
        # fori_loop (unrolled) bounds per-image live ranges while keeping the
        # whole body visible to the LLO scheduler.
        def body(t, carry):
            process_image(t)
            return carry

        lax.fori_loop(0, tb, body, 0, unroll=True)


def _sublane_multiple(itemsize):
    # f32 -> 8 rows/sublane-tile, bf16/f16 -> 16, int8/fp8 -> 32.
    return {4: 8, 2: 16, 1: 32}.get(itemsize, 8)


def _step_footprint_bytes(tb, th, H, C, W, itemsize):
    """Estimated VMEM per grid step: double-buffered I/O + f32 intermediates."""
    io = tb * (C + 1) * th * W * itemsize          # input block + output block
    if th < H:                                     # halo side input (2C rows)
        io += tb * 2 * C * W * itemsize
    intermediates = 10 * th * W * 4                # ~10 live (th, W) f32 planes
    return 2 * io + intermediates                  # x2 for double buffering


def _vmem_params():
    """(vmem_limit_bytes, per-step footprint budget) for this TPU generation."""
    try:
        cap = int(pltpu.get_tpu_info().vmem_capacity_bytes)
    except Exception:
        cap = 64 * 1024 * 1024                     # conservative (v7x-class)
    if cap >= 96 * 1024 * 1024:                    # v5e / v6e: 128 MiB VMEM
        limit = 80 * 1024 * 1024
    else:                                          # v7x-class: 64 MiB per TC
        limit = 40 * 1024 * 1024
    step_budget = (limit * 3) // 4                 # headroom for compiler scratch
    return limit, step_budget


def _pick_row_tile(C, H, W, itemsize, step_budget):
    """Largest legal row tile whose full per-step footprint fits the budget."""
    m = _sublane_multiple(itemsize)
    cands = sorted({d for d in range(m, H + 1, m) if H % d == 0} | {H})
    fitting = [d for d in cands
               if _step_footprint_bytes(1, d, H, C, W, itemsize) <= step_budget]
    if fitting:
        return fitting[-1]
    return cands[0]   # graceful degradation: smallest legal tile


def _pick_batch_tile(B, th, H, C, W, itemsize, step_budget, need_two_steps, cap=16):
    """Pack several small images per grid step to amortize per-step overhead."""
    best = 1
    for cand in range(2, min(B, cap) + 1):
        if B % cand:
            continue
        if need_two_steps and B // cand < 2:       # keep >=2 steps for 2-TC chips
            continue
        if _step_footprint_bytes(cand, th, H, C, W, itemsize) <= step_budget:
            best = cand
    return best


def _build_halos(x, th):
    """(B, nt, 2C, W): raw rows just above / below each row tile (zeros at edges)."""
    B, C, H, W = x.shape
    zeros = jnp.zeros((B, C, 1, W), x.dtype)
    tops = jnp.concatenate([zeros, x[:, :, th - 1:H - 1:th, :]], axis=2)  # (B,C,nt,W)
    bots = jnp.concatenate([x[:, :, th::th, :], zeros], axis=2)           # (B,C,nt,W)
    halos = jnp.concatenate([tops, bots], axis=1)     # (B, 2C, nt, W)
    return jnp.transpose(halos, (0, 2, 1, 3))         # (B, nt, 2C, W)


def grad_layer(x, *, block_h=None, block_b=None):
    """Pallas implementation of GradLayer.forward. x: (B, C, H, W), C in {1, 3}."""
    B, C, H, W = x.shape
    if C == 3:
        coeffs = _GRAY_COEFFS
    elif C == 1:
        coeffs = (1.0,)
    else:
        raise ValueError("GradLayer expects 1 or 3 input channels, got %d" % C)

    itemsize = jnp.dtype(x.dtype).itemsize
    vmem_limit, step_budget = _vmem_params()

    th = block_h if block_h is not None else _pick_row_tile(C, H, W, itemsize, step_budget)
    if H % th != 0:
        raise ValueError("block_h must divide H (got H=%d, block_h=%d)" % (H, th))
    nt = H // th
    has_halo = nt > 1

    if block_b is not None:
        tb = block_b
    else:
        need_two_steps = (nt == 1 and B >= 2)
        tb = _pick_batch_tile(B, th, H, C, W, itemsize, step_budget, need_two_steps)
    if B % tb != 0:
        raise ValueError("block_b must divide B (got B=%d, block_b=%d)" % (B, tb))
    nb = B // tb

    kernel = functools.partial(_grad_kernel, coeffs=coeffs, tb=tb, th=th, w=W,
                               has_halo=has_halo)
    in_specs = [pl.BlockSpec((tb, C, th, W), lambda b, r: (b, 0, r, 0))]
    args = [x]
    if has_halo:
        in_specs.append(pl.BlockSpec((tb, 1, 2 * C, W), lambda b, r: (b, r, 0, 0)))
        args.append(_build_halos(x, th))

    return pl.pallas_call(
        kernel,
        out_shape=jax.ShapeDtypeStruct((B, 1, H, W), x.dtype),
        grid=(nb, nt),
        in_specs=in_specs,
        out_specs=pl.BlockSpec((tb, 1, th, W), lambda b, r: (b, 0, r, 0)),
        compiler_params=pltpu.CompilerParams(
            dimension_semantics=("parallel", "parallel"),
            vmem_limit_bytes=vmem_limit,
        ),
    )(*args)


def _reference_grad_layer(x):
    """Plain-JAX reference (mirrors the PyTorch module) for verification."""
    B, C, H, W = x.shape
    xf = x.astype(jnp.float32)
    if C == 3:
        conv = jnp.asarray(_GRAY_COEFFS, dtype=jnp.float32).reshape(1, 3, 1, 1)
        g = (xf * conv).sum(axis=1, keepdims=True)
    else:
        g = xf
    gp = jnp.pad(g, ((0, 0), (0, 0), (1, 1), (1, 1)))
    x_v = gp[:, :, 2:, 1:-1] - gp[:, :, :-2, 1:-1]
    x_h = gp[:, :, 1:-1, 2:] - gp[:, :, 1:-1, :-2]
    return jnp.sqrt(x_v * x_v + x_h * x_h + 1e-6).astype(x.dtype)


if __name__ == "__main__":
    key = jax.random.PRNGKey(0)
    # Small but non-trivial: lane-dense W (=128), H big enough to exercise
    # row tiling and halo handling when forced below.
    x = jax.random.uniform(key, (2, 3, 32, 128), dtype=jnp.float32)
    ref = _reference_grad_layer(x)

    # 1) Auto tiling (small image -> whole-image tile, no halo, grid=(2,1)).
    out = jax.block_until_ready(grad_layer(x))
    assert out.shape == (2, 1, 32, 128), out.shape
    assert jnp.allclose(out, ref, atol=1e-5, rtol=1e-5), "auto-tiled mismatch"

    # 2) Forced row tiling + batch blocking (exercises halo path + fori_loop).
    out_tiled = jax.block_until_ready(grad_layer(x, block_h=8, block_b=2))
    assert jnp.allclose(out_tiled, ref, atol=1e-5, rtol=1e-5), "row-tiled mismatch"

    # 3) Single-channel path (no gray conversion, unit coeff skipped).
    x1 = jax.random.uniform(jax.random.PRNGKey(1), (2, 1, 16, 128), dtype=jnp.float32)
    out1 = jax.block_until_ready(grad_layer(x1))
    assert jnp.allclose(out1, _reference_grad_layer(x1), atol=1e-5, rtol=1e-5), \
        "single-channel mismatch"

    # 4) bf16 I/O with 16-row tiles (16-bit sublane-multiple path + halos).
    x_bf = x.astype(jnp.bfloat16)
    out_bf = jax.block_until_ready(grad_layer(x_bf, block_h=16, block_b=1))
    ref_bf = _reference_grad_layer(x_bf)
    assert jnp.allclose(out_bf.astype(jnp.float32), ref_bf.astype(jnp.float32),
                        atol=2e-2, rtol=2e-2), "bf16 mismatch"

    print("KERNEL_OK")
</pallas_src>

<mosaic_0001>
module attributes {stable_mosaic.version = 11 : i64} {
  func.func @_grad_kernel(%arg0: i32, %arg1: i32, %arg2: memref<1x3x32x128xf32, #tpu.memory_space<vmem>>, %arg3: memref<1x1x32x128xf32, #tpu.memory_space<vmem>>) attributes {dimension_semantics = [#tpu.dimension_semantics<parallel>, #tpu.dimension_semantics<parallel>], iteration_bounds = array<i64: 2, 1>, scalar_prefetch = 0 : i64, scratch_operands = 0 : i64, tpu.core_type = #tpu.core_type<tc>, window_params = [{transform_indices = @transform_0, window_bounds = array<i64: 1, 3, 32, 128>}, {transform_indices = @transform_1, window_bounds = array<i64: 1, 1, 32, 128>}]} {
    %0 = tpu.iota {dimensions = array<i32: 0>} : vector<32x128xi32>
    %1 = tpu.iota {dimensions = array<i32: 1>} : vector<32x128xi32>
    %c0_i32 = arith.constant 0 : i32
    %2 = vector.broadcast %c0_i32 : i32 to vector<32x128xi32>
    %3 = arith.cmpi eq, %0, %2 : vector<32x128xi32>
    %c31_i32 = arith.constant 31 : i32
    %4 = vector.broadcast %c31_i32 : i32 to vector<32x128xi32>
    %5 = arith.cmpi eq, %0, %4 : vector<32x128xi32>
    %c0_i32_0 = arith.constant 0 : i32
    %6 = vector.broadcast %c0_i32_0 : i32 to vector<32x128xi32>
    %7 = arith.cmpi eq, %1, %6 : vector<32x128xi32>
    %c127_i32 = arith.constant 127 : i32
    %8 = vector.broadcast %c127_i32 : i32 to vector<32x128xi32>
    %9 = arith.cmpi eq, %1, %8 : vector<32x128xi32>
    %c0 = arith.constant 0 : index
    %c0_1 = arith.constant 0 : index
    %c0_2 = arith.constant 0 : index
    %c0_3 = arith.constant 0 : index
    %10 = vector.load %arg2[%c0, %c0_1, %c0_2, %c0_3] : memref<1x3x32x128xf32, #tpu.memory_space<vmem>>, vector<1x1x32x128xf32>
    %11 = vector.shape_cast %10 : vector<1x1x32x128xf32> to vector<32x128xf32>
    %cst = arith.constant 0.256789058 : f32
    %12 = vector.broadcast %cst : f32 to vector<32x128xf32>
    %13 = arith.mulf %12, %11 : vector<32x128xf32>
    %c0_4 = arith.constant 0 : index
    %c1 = arith.constant 1 : index
    %c0_5 = arith.constant 0 : index
    %c0_6 = arith.constant 0 : index
    %14 = vector.load %arg2[%c0_4, %c1, %c0_5, %c0_6] : memref<1x3x32x128xf32, #tpu.memory_space<vmem>>, vector<1x1x32x128xf32>
    %15 = vector.shape_cast %14 : vector<1x1x32x128xf32> to vector<32x128xf32>
    %cst_7 = arith.constant 0.504128933 : f32
    %16 = vector.broadcast %cst_7 : f32 to vector<32x128xf32>
    %17 = arith.mulf %16, %15 : vector<32x128xf32>
    %18 = arith.addf %13, %17 : vector<32x128xf32>
    %c0_8 = arith.constant 0 : index
    %c2 = arith.constant 2 : index
    %c0_9 = arith.constant 0 : index
    %c0_10 = arith.constant 0 : index
    %19 = vector.load %arg2[%c0_8, %c2, %c0_9, %c0_10] : memref<1x3x32x128xf32, #tpu.memory_space<vmem>>, vector<1x1x32x128xf32>
    %20 = vector.shape_cast %19 : vector<1x1x32x128xf32> to vector<32x128xf32>
    %cst_11 = arith.constant 0.0979062467 : f32
    %21 = vector.broadcast %cst_11 : f32 to vector<32x128xf32>
    %22 = arith.mulf %21, %20 : vector<32x128xf32>
    %23 = arith.addf %18, %22 : vector<32x128xf32>
    %c1_i32 = arith.constant 1 : i32
    %24 = tpu.dynamic_rotate %23 by %c1_i32 dim 0 : vector<32x128xf32>, i32 -> vector<32x128xf32>
    %c31_i32_12 = arith.constant 31 : i32
    %25 = tpu.dynamic_rotate %23 by %c31_i32_12 dim 0 : vector<32x128xf32>, i32 -> vector<32x128xf32>
    %cst_13 = arith.constant 0.000000e+00 : f32
    %26 = vector.broadcast %cst_13 : f32 to vector<32x128xf32>
    %27 = arith.select %3, %26, %24 : vector<32x128xi1>, vector<32x128xf32>
    %cst_14 = arith.constant 0.000000e+00 : f32
    %28 = vector.broadcast %cst_14 : f32 to vector<32x128xf32>
    %29 = arith.select %5, %28, %25 : vector<32x128xi1>, vector<32x128xf32>
    %30 = arith.subf %29, %27 : vector<32x128xf32>
    %c1_i32_15 = arith.constant 1 : i32
    %31 = tpu.dynamic_rotate %23 by %c1_i32_15 dim 1 : vector<32x128xf32>, i32 -> vector<32x128xf32>
    %c127_i32_16 = arith.constant 127 : i32
    %32 = tpu.dynamic_rotate %23 by %c127_i32_16 dim 1 : vector<32x128xf32>, i32 -> vector<32x128xf32>
    %cst_17 = arith.constant 0.000000e+00 : f32
    %33 = vector.broadcast %cst_17 : f32 to vector<32x128xf32>
    %34 = arith.select %9, %33, %32 : vector<32x128xi1>, vector<32x128xf32>
    %cst_18 = arith.constant 0.000000e+00 : f32
    %35 = vector.broadcast %cst_18 : f32 to vector<32x128xf32>
    %36 = arith.select %7, %35, %31 : vector<32x128xi1>, vector<32x128xf32>
    %37 = arith.subf %34, %36 : vector<32x128xf32>
    %38 = arith.mulf %30, %30 : vector<32x128xf32>
    %39 = arith.mulf %37, %37 : vector<32x128xf32>
    %40 = arith.addf %38, %39 : vector<32x128xf32>
    %cst_19 = arith.constant 9.99999997E-7 : f32
    %41 = vector.broadcast %cst_19 : f32 to vector<32x128xf32>
    %42 = arith.addf %40, %41 : vector<32x128xf32>
    %43 = math.sqrt %42 : vector<32x128xf32>
    %c0_20 = arith.constant 0 : index
    %c0_21 = arith.constant 0 : index
    %c0_22 = arith.constant 0 : index
    %c0_23 = arith.constant 0 : index
    %44 = vector.load %arg3[%c0_20, %c0_21, %c0_22, %c0_23] : memref<1x1x32x128xf32, #tpu.memory_space<vmem>>, vector<1x1x32x128xf32>
    %45 = vector.shape_cast %44 : vector<1x1x32x128xf32> to vector<32x128xf32>
    %46 = vector.shape_cast %43 : vector<32x128xf32> to vector<1x1x32x128xf32>
    tpu.vector_store %arg3[%c0_20, %c0_21, %c0_22, %c0_23], %46 {strides = array<i32>} : memref<1x1x32x128xf32, #tpu.memory_space<vmem>>, vector<1x1x32x128xf32>,
    return
  }
  func.func @transform_0(%arg0: i32, %arg1: i32) -> (i32, i32, i32, i32) {
    %c0_i32 = arith.constant 0 : i32
    %c0_i32_0 = arith.constant 0 : i32
    %c0_i32_1 = arith.constant 0 : i32
    return %arg0, %c0_i32, %arg1, %c0_i32_0 : i32, i32, i32, i32
  }
  func.func @transform_1(%arg0: i32, %arg1: i32) -> (i32, i32, i32, i32) {
    %c0_i32 = arith.constant 0 : i32
    %c0_i32_0 = arith.constant 0 : i32
    %c0_i32_1 = arith.constant 0 : i32
    return %arg0, %c0_i32, %arg1, %c0_i32_0 : i32, i32, i32, i32
  }
}

</mosaic_0001>

<llo_original>
// kernel: tpu_custom_call.1
$region0: #{tpu_custom_call.1}
  #allocation0 [shape = 'u32[]', space=smem, size = 0x4, offset = 0x4, fixed_abs, tag = 'smem constant byte address 0x4 - core index']
  #allocation1 [shape = 'u32[144,128]{1,0:T(1,128)}', space=vmem, size = 0x12000, scoped, tag = 'internal scratch']
  %s0 = inlined_call_operand.hbm [shape: f32[2,3,32,128], index: 0, kind: input, shape index: {}]
  %s1 = inlined_call_operand.hbm [shape: f32[2,1,32,128], index: 1, kind: output, shape index: {}]
  %s2 = sld [smem:[#allocation0]]
  $region41: #{tpu_custom_call.1} parent=0
    _
  %s4 = ssub.s32 1, %s2
  %s5 = scalar_select 0, %s4, %s2
  $region1: #{tpu_custom_call.1} parent=0
    #allocation2 [shape = 'u8[98304]{0}', space=vmem, size = 0x18000, scoped, tag = 'input window, operand 0']
    #allocation3 [shape = 's32[2]{0}', space=sflag, size = 0x8, scoped, tag = 'scoped memory for tpu_custom_call.1']
    #allocation4 [shape = 's32[2]{0}', space=sflag, size = 0x8, scoped, tag = 'scoped memory for tpu_custom_call.1']
    #allocation5 [shape = 'u8[32768]{0}', space=vmem, size = 0x8000, scoped, tag = 'output window, operand 0']
    %6 = vsyncpa [#allocation3], 0
    %s7 = scalar_lea.sflag [#allocation3], 1
    %8 = vsyncpa %s7, 0
    %9 = vsyncpa [#allocation4], 0
    %s10 = scalar_lea.sflag [#allocation4], 1
    %11 = vsyncpa %s10, 0
    loop: start=0, step=1, limit=4
    $region2: #{tpu_custom_call.1} parent=1 // loop_pre_header
      _
    $region3: #{tpu_custom_call.1} parent=1 // loop_header
      %s13 = sphi 0, %s17
      %p14 = scmp.ge.s32.totalorder %s13, 4
      %s20 = sphi 0, %s32
      %s21 = sphi 0, %s28
      %s22 = sphi 0, %s20
      %s23 = sphi 0, %s21
      %s24 = sphi 0, %s22
      %s25 = sphi 0, %s23
      %s37 = sphi 0, %s39
      %s40 = sphi 0, %s37
      %s41 = sphi 0, %s40
      %s57 = sphi 0, %s41
      %s65 = sphi 0, %s67
      %s68 = sphi 0, %s65
      %s69 = sphi 0, %s68
      %s85 = sphi 0, %s69
    $region4: #{tpu_custom_call.1} parent=1 // loop_header_branch
      %16 = sbr.rel (%p14) target = $region8
    $region5: #{tpu_custom_call.1} parent=1 // loop_body
      %s18 = ssub.s32 %s13, 1
      %s19 = ssub.s32 %s13, 2
      %s26 = sadd.s32 1, %s21
      %p27 = scmp.ge.s32.totalorder %s26, 1
      %s28 = scalar_select %p27, 0, %s26
      %s29 = sadd.s32 1, %s20
      %s30 = scalar_select %p27, %s29, %s20
      %p31 = scmp.ge.s32.totalorder %s30, 2
      %s32 = scalar_select %p31, 0, %s30
      %s33 = ssub.s32 %s20, %s32
      %s34 = ssub.s32 %s21, %s28
      %s35 = sor.u32 %s33, %s34
      %p36 = scmp.eq.s32.totalorder %s35, 0
      %s38 = sadd.s32 %s37, 1
      %s39 = scalar_select %p36, %s37, %s38
      %p42 = pneg %p36
      %p43 = scmp.eq.s32.totalorder %s13, 1
      %p44 = por %p42, %p43
      %p45 = scmp.ne.s32.totalorder %s37, %s40
      %p46 = scmp.eq.s32.totalorder %s13, 0
      %p47 = por %p45, %p46
      %p48 = scmp.ne.s32.totalorder %s37, %s40
      %p49 = scmp.eq.s32.totalorder %s18, 1
      %p50 = por %p48, %p49
      %p51 = scmp.ne.s32.totalorder %s40, %s41
      %p52 = scmp.eq.s32.totalorder %s18, 0
      %p53 = por %p51, %p52
      %p54 = scmp.ne.s32.totalorder %s40, %s41
      %p55 = scmp.eq.s32.totalorder %s19, 1
      %p56 = por %p54, %p55
      %p58 = scmp.ne.s32.totalorder %s41, %s57
      %p59 = scmp.eq.s32.totalorder %s19, 0
      %p60 = por %p58, %p59
      %s61 = ssub.s32 %s20, %s32
      %s62 = ssub.s32 %s21, %s28
      %s63 = sor.u32 %s61, %s62
      %p64 = scmp.eq.s32.totalorder %s63, 0
      %s66 = sadd.s32 %s65, 1
      %s67 = scalar_select %p64, %s65, %s66
      %p70 = pneg %p64
      %p71 = scmp.eq.s32.totalorder %s13, 1
      %p72 = por %p70, %p71
      %p73 = scmp.ne.s32.totalorder %s65, %s68
      %p74 = scmp.eq.s32.totalorder %s13, 0
      %p75 = por %p73, %p74
      %p76 = scmp.ne.s32.totalorder %s65, %s68
      %p77 = scmp.eq.s32.totalorder %s18, 1
      %p78 = por %p76, %p77
      %p79 = scmp.ne.s32.totalorder %s68, %s69
      %p80 = scmp.eq.s32.totalorder %s18, 0
      %p81 = por %p79, %p80
      %p82 = scmp.ne.s32.totalorder %s68, %s69
      %p83 = scmp.eq.s32.totalorder %s19, 1
      %p84 = por %p82, %p83
      %p86 = scmp.ne.s32.totalorder %s69, %s85
      %p87 = scmp.eq.s32.totalorder %s19, 0
      %p88 = por %p86, %p87
      %p89 = scmp.le.s32.totalorder 1, %s13
      %p90 = scmp.lt.s32.totalorder %s13, 3
      %p91 = pnand %p89, %p90
      %p92 = pneg %p91
      // Predicated region
      $region9: #{tpu_custom_call.1} parent=5 // pred_check
        _
      $region10: #{tpu_custom_call.1} parent=5 // pred_check_branch
        %94 = sbr.rel (%p91) target = $region12
      $region11: #{tpu_custom_call.1} parent=5 // pred_region
        %s95 = ssub.s32 %s13, 1
      $region12: #{tpu_custom_call.1} parent=5 // pred_fallthru
        _
      %p96 = scmp.lt.s32.totalorder %s13, 2
      // Predicated region
      $region13: #{tpu_custom_call.1} parent=5 // pred_check
        %p97 = pneg %p96
      $region14: #{tpu_custom_call.1} parent=5 // pred_check_branch
        %99 = sbr.rel (%p97) target = $region16
      $region15: #{tpu_custom_call.1} parent=5 // pred_region
        // Predicated region
        $region17: #{tpu_custom_call.1} parent=15 // pred_check
          %p100 = pneg %p47
        $region18: #{tpu_custom_call.1} parent=15 // pred_check_branch
          %102 = sbr.rel (%p100) target = $region20
        $region19: #{tpu_custom_call.1} parent=15 // pred_region
          %s103 = sand.u32 %s37, 1
          %s104 = scalar_lea.sflag [#allocation3], %s103
          %s105 = sand.u32 %s37, 1
          %s106 = smul.addr %s105, 96
          %s107 = scalar_lea.vmem [#allocation2], %s106
          %s108 = smul.u32 4, %s21
          %s110 = ssub.s32 1536, 1536
          %111 = vsyncadd %s104, %s110
          %s112 = smul.addr %s20, 12
          %s113 = sadd.s32 %s108, %s112
          %s114 = smul.addr %s113, 128
          %s115 = scalar_lea.hbm %s0, %s114
          %s116 = sshll.u32 %s107, 4
          %s117 = int_to_ptr.vmem [resolvable:$true] %s116
          %122 = dma.hbm_to_vmem [thread:$0]  %s115, 1536, %s117, %s104, 128, 128, 8
        $region20: #{tpu_custom_call.1} parent=15 // pred_fallthru
          _
      $region16: #{tpu_custom_call.1} parent=5 // pred_fallthru
        _
      %p123 = scmp.le.s32.totalorder 1, %s13
      %p124 = scmp.lt.s32.totalorder %s13, 3
      %p125 = pnand %p123, %p124
      %p126 = pneg %p125
      // Predicated region
      $region21: #{tpu_custom_call.1} parent=5 // pred_check
        _
      $region22: #{tpu_custom_call.1} parent=5 // pred_check_branch
        %128 = sbr.rel (%p125) target = $region24
      $region23: #{tpu_custom_call.1} parent=5 // pred_region
        %s129 = ssub.s32 %s13, 1
        %s130 = sand.u32 %s40, 1
        %s131 = scalar_lea.sflag [#allocation3], %s130
        %s132 = sand.u32 %s40, 1
        %s133 = smul.addr %s132, 96
        %s134 = scalar_lea.vmem [#allocation2], %s133
        // Predicated region
        $region25: #{tpu_custom_call.1} parent=23 // pred_check
          %p135 = pneg %p53
        $region26: #{tpu_custom_call.1} parent=23 // pred_check_branch
          %137 = sbr.rel (%p135) target = $region28
        $region27: #{tpu_custom_call.1} parent=23 // pred_region
          %138 = dma.done %s131, 1536
        $region28: #{tpu_custom_call.1} parent=23 // pred_fallthru
          _
        %s139 = sand.u32 %s40, 1
        %s140 = scalar_lea.sflag [#allocation3], %s139
        %s141 = sand.u32 %s40, 1
        %s142 = smul.addr %s141, 96
        %s143 = scalar_lea.vmem [#allocation2], %s142
        %p144 = pneg %p53
        %p145 = pneg %p50
        %p146 = pneg %p81
        %p147 = pneg %p78
        %s148 = sand.u32 %s68, 1
        %s149 = scalar_lea.sflag [#allocation4], %s148
        %s150 = sand.u32 %s68, 1
        %s151 = smul.addr %s150, 32
        %s152 = scalar_lea.vmem [#allocation5], %s151
        %s153 = smul.u32 4, %s23
        %s154 = smul.u32 4, %s23
        %v155 = vlaneseq
        %v156 = vshrl.u32 %v155, 7
        %v157 = vadd.s32 %v156, 8
        %v158 = vadd.s32 %v156, 16
        %v159 = vadd.s32 %v156, 24
        %v160 = vlaneseq
        %v161 = vand.u32 %v160, 127
        %vm162 = vcmp.eq.s32.totalorder %v156, 0
        %vm163 = vcmp.eq.s32.totalorder %v157, 0
        %vm164 = vcmp.eq.s32.totalorder %v158, 0
        %vm165 = vcmp.eq.s32.totalorder %v159, 0
        %vm166 = vcmp.eq.s32.totalorder %v156, 31
        %vm167 = vcmp.eq.s32.totalorder %v157, 31
        %vm168 = vcmp.eq.s32.totalorder %v158, 31
        %vm169 = vcmp.eq.s32.totalorder %v159, 31
        %vm170 = vcmp.eq.s32.totalorder %v161, 0
        %vm171 = vcmp.eq.s32.totalorder %v161, 127
        %v172 = vld [vmem:[%s134] sm:$0xff]
        %v173 = vld [vmem:[%s134 + $0x8] sm:$0xff]
        %v174 = vld [vmem:[%s134 + $0x10] sm:$0xff]
        %v175 = vld [vmem:[%s134 + $0x18] sm:$0xff]
        %v176 = vmul.f32 %v172, 0.25678906
        %v177 = vmul.f32 %v173, 0.25678906
        %v178 = vmul.f32 %v174, 0.25678906
        %v179 = vmul.f32 %v175, 0.25678906
        %s180 = scalar_lea.vmem %s134, 32 [#allocation2]
        %v181 = vld [vmem:[%s180] sm:$0xff]
        %v182 = vld [vmem:[%s180 + $0x8] sm:$0xff]
        %v183 = vld [vmem:[%s180 + $0x10] sm:$0xff]
        %v184 = vld [vmem:[%s180 + $0x18] sm:$0xff]
        %v185 = vmul.f32 %v181, 0.50412893
        %v186 = vmul.f32 %v182, 0.50412893
        %v187 = vmul.f32 %v183, 0.50412893
        %v188 = vmul.f32 %v184, 0.50412893
        %v189 = vadd.f32 %v176, %v185
        %v190 = vadd.f32 %v177, %v186
        %v191 = vadd.f32 %v178, %v187
        %v192 = vadd.f32 %v179, %v188
        %s193 = scalar_lea.vmem %s134, 64 [#allocation2]
        %v194 = vld [vmem:[%s193] sm:$0xff]
        %v195 = vld [vmem:[%s193 + $0x8] sm:$0xff]
        %v196 = vld [vmem:[%s193 + $0x10] sm:$0xff]
        %v197 = vld [vmem:[%s193 + $0x18] sm:$0xff]
        %v198 = vmul.f32 %v194, 0.09790625
        %v199 = vmul.f32 %v195, 0.09790625
        %v200 = vmul.f32 %v196, 0.09790625
        %v201 = vmul.f32 %v197, 0.09790625
        %v202 = vadd.f32 %v189, %v198
        %v203 = vadd.f32 %v190, %v199
        %v204 = vadd.f32 %v191, %v200
        %v205 = vadd.f32 %v192, %v201
        %v206 = vrot.slane %v202, 7
        %v207 = vrot.slane %v203, 7
        %v208 = vrot.slane %v204, 7
        %v209 = vrot.slane %v205, 7
        %vm210 = vcmp.lt.s32.totalorder %v156, 1
        %v211 = vsel %vm210, %v208, %v209
        %v212 = vsel %vm210, %v207, %v208
        %v213 = vsel %vm210, %v206, %v207
        %v214 = vsel %vm210, %v209, %v206
        %v215 = vrot.slane %v202, 1
        %v216 = vrot.slane %v203, 1
        %v217 = vrot.slane %v204, 1
        %v218 = vrot.slane %v205, 1
        %vm219 = vcmp.lt.s32.totalorder %v156, 7
        %v220 = vsel %vm219, %v217, %v218
        %v221 = vsel %vm219, %v216, %v217
        %v222 = vsel %vm219, %v215, %v216
        %v223 = vsel %vm219, %v218, %v215
        %v224 = vsel %vm162, 0.0, %v214
        %v225 = vsel %vm163, 0.0, %v213
        %v226 = vsel %vm164, 0.0, %v212
        %v227 = vsel %vm165, 0.0, %v211
        %v228 = vsel %vm166, 0.0, %v222
        %v229 = vsel %vm167, 0.0, %v221
        %v230 = vsel %vm168, 0.0, %v220
        %v231 = vsel %vm169, 0.0, %v223
        %v232 = vsub.f32 %v228, %v224
        %v233 = vsub.f32 %v229, %v225
        %v234 = vsub.f32 %v230, %v226
        %v235 = vsub.f32 %v231, %v227
        %236 = vrot.lane.b32.xlu0 %v202, 1
        %v237 = vpop.permute.xlu0 %236
        %238 = vrot.lane.b32.xlu0 %v203, 1
        %v239 = vpop.permute.xlu0 %238
        %240 = vrot.lane.b32.xlu0 %v204, 1
        %v241 = vpop.permute.xlu0 %240
        %242 = vrot.lane.b32.xlu0 %v205, 1
        %v243 = vpop.permute.xlu0 %242
        %244 = vrot.lane.b32.xlu0 %v202, 127
        %v245 = vpop.permute.xlu0 %244
        %246 = vrot.lane.b32.xlu0 %v203, 127
        %v247 = vpop.permute.xlu0 %246
        %248 = vrot.lane.b32.xlu0 %v204, 127
        %v249 = vpop.permute.xlu0 %248
        %250 = vrot.lane.b32.xlu0 %v205, 127
        %v251 = vpop.permute.xlu0 %250
        %v252 = vsel %vm171, 0.0, %v245
        %v253 = vsel %vm171, 0.0, %v247
        %v254 = vsel %vm171, 0.0, %v249
        %v255 = vsel %vm171, 0.0, %v251
        %v256 = vsel %vm170, 0.0, %v237
        %v257 = vsel %vm170, 0.0, %v239
        %v258 = vsel %vm170, 0.0, %v241
        %v259 = vsel %vm170, 0.0, %v243
        %v260 = vsub.f32 %v252, %v256
        %v261 = vsub.f32 %v253, %v257
        %v262 = vsub.f32 %v254, %v258
        %v263 = vsub.f32 %v255, %v259
        %v264 = vmul.f32 %v232, %v232
        %v265 = vmul.f32 %v233, %v233
        %v266 = vmul.f32 %v234, %v234
        %v267 = vmul.f32 %v235, %v235
        %v268 = vmul.f32 %v260, %v260
        %v269 = vmul.f32 %v261, %v261
        %v270 = vmul.f32 %v262, %v262
        %v271 = vmul.f32 %v263, %v263
        %v272 = vadd.f32 %v264, %v268
        %v273 = vadd.f32 %v265, %v269
        %v274 = vadd.f32 %v266, %v270
        %v275 = vadd.f32 %v267, %v271
        %v276 = vadd.f32 %v272, 1e-06
        %v277 = vadd.f32 %v273, 1e-06
        %v278 = vadd.f32 %v274, 1e-06
        %v279 = vadd.f32 %v275, 1e-06
        %v280 = vrsqrt.pop %v276
        %v281 = vmul.f32 %v276, %v280
        %vm282 = vcmp.eq.f32.partialorder %v276, inf
        %v283 = vsel %vm282, %v276, %v281
        %vm284 = vcmp.eq.f32.partialorder %v276, 0.0
        %v285 = vand.u32 %v276, 2147483648
        %v286 = vsel %vm284, %v285, %v283
        %v287 = vrsqrt.pop %v277
        %v288 = vmul.f32 %v277, %v287
        %vm289 = vcmp.eq.f32.partialorder %v277, inf
        %v290 = vsel %vm289, %v277, %v288
        %vm291 = vcmp.eq.f32.partialorder %v277, 0.0
        %v292 = vand.u32 %v277, 2147483648
        %v293 = vsel %vm291, %v292, %v290
        %v294 = vrsqrt.pop %v278
        %v295 = vmul.f32 %v278, %v294
        %vm296 = vcmp.eq.f32.partialorder %v278, inf
        %v297 = vsel %vm296, %v278, %v295
        %vm298 = vcmp.eq.f32.partialorder %v278, 0.0
        %v299 = vand.u32 %v278, 2147483648
        %v300 = vsel %vm298, %v299, %v297
        %v301 = vrsqrt.pop %v279
        %v302 = vmul.f32 %v279, %v301
        %vm303 = vcmp.eq.f32.partialorder %v279, inf
        %v304 = vsel %vm303, %v279, %v302
        %vm305 = vcmp.eq.f32.partialorder %v279, 0.0
        %v306 = vand.u32 %v279, 2147483648
        %v307 = vsel %vm305, %v306, %v304
        %308 = vst [vmem:[%s152] sm:$0xff] %v286
        %309 = vst [vmem:[%s152 + $0x8] sm:$0xff] %v293
        %310 = vst [vmem:[%s152 + $0x10] sm:$0xff] %v300
        %311 = vst [vmem:[%s152 + $0x18] sm:$0xff] %v307
        %s312 = sand.u32 %s68, 1
        %s313 = scalar_lea.sflag [#allocation4], %s312
        %s314 = sand.u32 %s68, 1
        %s315 = smul.addr %s314, 32
        %s316 = scalar_lea.vmem [#allocation5], %s315
        // Predicated region
        $region29: #{tpu_custom_call.1} parent=23 // pred_check
          %p317 = pneg %p78
        $region30: #{tpu_custom_call.1} parent=23 // pred_check_branch
          %319 = sbr.rel (%p317) target = $region32
        $region31: #{tpu_custom_call.1} parent=23 // pred_region
          %s320 = smul.u32 4, %s23
          %s322 = ssub.s32 512, 512
          %323 = vsyncadd %s313, %s322
          %s324 = smul.addr %s22, 4
          %s325 = sadd.s32 %s320, %s324
          %s326 = smul.addr %s325, 128
          %s327 = scalar_lea.hbm %s1, %s326
          %s328 = sshll.u32 %s316, 4
          %s329 = int_to_ptr.vmem [resolvable:$true] %s328
          %334 = dma.vmem_to_hbm [thread:$0]  %s329, 512, %s327, %s313, 128, 128, 8
        $region32: #{tpu_custom_call.1} parent=23 // pred_fallthru
          _
      $region24: #{tpu_custom_call.1} parent=5 // pred_fallthru
        _
      %p335 = scmp.le.s32.totalorder 2, %s13
      // Predicated region
      $region33: #{tpu_custom_call.1} parent=5 // pred_check
        %p336 = pneg %p335
      $region34: #{tpu_custom_call.1} parent=5 // pred_check_branch
        %338 = sbr.rel (%p336) target = $region36
      $region35: #{tpu_custom_call.1} parent=5 // pred_region
        %s339 = ssub.s32 %s13, 2
        // Predicated region
        $region37: #{tpu_custom_call.1} parent=35 // pred_check
          %p340 = pneg %p84
        $region38: #{tpu_custom_call.1} parent=35 // pred_check_branch
          %342 = sbr.rel (%p340) target = $region40
        $region39: #{tpu_custom_call.1} parent=35 // pred_region
          %s343 = sand.u32 %s69, 1
          %s344 = scalar_lea.sflag [#allocation4], %s343
          %s345 = sand.u32 %s69, 1
          %s346 = smul.addr %s345, 32
          %s347 = scalar_lea.vmem [#allocation5], %s346
          %348 = dma.done %s344, 512
        $region40: #{tpu_custom_call.1} parent=35 // pred_fallthru
          _
      $region36: #{tpu_custom_call.1} parent=5 // pred_fallthru
        _
    $region6: #{tpu_custom_call.1} parent=1 // loop_footer
      %s17 = sadd.s32 1, %s13
    $region7: #{tpu_custom_call.1} parent=1 // loop_footer_branch
      %12 = sbr.rel target = $region3
    $region8: #{tpu_custom_call.1} parent=1 // loop_exit
      _
    %349 = vsyncpa [#allocation3], 1
    %s350 = scalar_lea.sflag [#allocation3], 1
    %351 = vsyncpa %s350, 1
    %352 = vsyncpa [#allocation4], 1
    %s353 = scalar_lea.sflag [#allocation4], 1
    %354 = vsyncpa %s353, 1

</llo_original>
